<compile_context>
chip_gen: v7x
topology: tpu7x:2x2x1
jax: 0.10.0
libtpu: 0.0.40
codegen_flags: <defaults>
</compile_context>

<pallas_src>
import functools
import math

import jax
import jax.numpy as jnp
import numpy as np
from jax import lax
from jax.experimental import pallas as pl
from jax.experimental.pallas import tpu as pltpu


def _round_up(x, m):
    return ((x + m - 1) // m) * m


def _pick_t_tile(T, B_pad, Vp, target_bytes=4 << 20):
    """Largest divisor of T whose logits tile (rows x Vp f32) stays <= target."""
    max_rows = max(B_pad, target_bytes // (Vp * 4))
    t_max = max(1, max_rows // B_pad)
    t_tile = 1
    for d in range(1, T + 1):
        if T % d == 0 and d <= t_max:
            t_tile = d
    return t_tile


def _compiler_params(semantics, est_bytes):
    # Explicit VMEM limit: >= the 32 MiB v6e/v7x default (raises v5e's 16 MiB
    # default); tile sizing keeps usage far below v7x's 64 MiB physical VMEM.
    limit = int(min(48 * 1024 * 1024, max(32 * 1024 * 1024, 2 * est_bytes)))
    return pltpu.CompilerParams(dimension_semantics=semantics,
                                vmem_limit_bytes=limit)


# --------------------------- K1: embed + x-projection ---------------------------
def _embed_xproj_kernel(idx_ref, wte_ref, wx_ref, bxh_ref, xproj_ref):
    # idx_ref:   (1, t_tile, B_pad) int32   token ids for this tile (T-major)
    # wte_ref:   (Vp, Ep) bf16              embedding table (resident)
    # wx_ref:    (Ep, Hp) bf16              x-part of cell weight, transposed (resident)
    # bxh_ref:   (1, Hp)  f32               cell bias (resident)
    # xproj_ref: (rows, Hp) f32             out: x_t @ W_x^T + b for this tile
    _, tt, bp = idx_ref.shape
    rows, _ = xproj_ref.shape
    Vp = wte_ref.shape[0]

    ids = idx_ref[0]                                              # (tt, bp)
    col = lax.broadcasted_iota(jnp.int32, (tt, bp, Vp), 2)
    onehot = (col == ids[..., None]).astype(jnp.float32)          # (tt, bp, Vp)
    onehot = onehot.reshape(rows, Vp).astype(jnp.bfloat16)        # lane-dense 2D

    emb = jnp.dot(onehot, wte_ref[...],
                  preferred_element_type=jnp.float32)             # (rows, Ep)
    xproj_ref[...] = (jnp.dot(emb.astype(jnp.bfloat16), wx_ref[...],
                              preferred_element_type=jnp.float32)
                      + bxh_ref[...])


# ------------------------------ K2: recurrence -----------------------------------
def _recurrence_kernel(xproj_ref, wh_ref, start_ref, hid_ref, *, T, B_pad):
    # xproj_ref: (Np, Hp) f32   precomputed x-projections (T-major)
    # wh_ref:    (Hp, Hp) f32   h-part of cell weight, transposed
    # start_ref: (1, Hp)  f32   learned initial hidden state
    # hid_ref:   (Np, Hp) f32   out: all hidden states (T-major)
    Hp = wh_ref.shape[0]
    wh = wh_ref[...]                                   # loop-invariant load
    h0 = jnp.broadcast_to(start_ref[...], (B_pad, Hp))

    def step(t, hprev):
        row = pl.multiple_of(t * B_pad, 8)             # sublane-aligned window
        xp = xproj_ref[pl.ds(row, B_pad), :]
        ht = jnp.tanh(xp + jnp.dot(hprev, wh,
                                   preferred_element_type=jnp.float32,
                                   precision=lax.Precision.HIGHEST))
        hid_ref[pl.ds(row, B_pad), :] = ht
        return ht

    # Bounded unroll: keeps LLO scheduling visibility without exploding
    # instruction memory / vreg live ranges at realistic T.
    lax.fori_loop(0, T, step, h0, unroll=math.gcd(T, 8))


# --------------------------- K3: lm_head (+ fused CE) ----------------------------
def _head_kernel(hid_ref, wlm_ref, blm_ref, logits_ref):
    logits_ref[...] = (jnp.dot(hid_ref[...].astype(jnp.bfloat16), wlm_ref[...],
                               preferred_element_type=jnp.float32)
                       + blm_ref[...])


def _head_ce_kernel(hid_ref, tgt_ref, wlm_ref, blm_ref, logits_ref, loss_ref,
                    acc_ref, *, V):
    # hid_ref:    (rows, Hp) f32            hidden states for this tile
    # tgt_ref:    (1, t_tile, B_pad) int32  targets (-1 = ignore / batch pad)
    # wlm_ref:    (Hp, Vp) bf16             lm_head weight^T (resident)
    # blm_ref:    (1, Vp)  f32              lm_head bias (resident)
    # logits_ref: (rows, Vp) f32            out (lane-dense whole-tile store)
    # loss_ref:   (1, 1) f32                out: mean CE, written only in last tile
    # acc_ref:    SMEM (2,) f32             running [sum(nll), valid count]
    i = pl.program_id(0)
    _, Vp = logits_ref.shape
    _, tt, bp = tgt_ref.shape

    @pl.when(i == 0)
    def _init():
        acc_ref[0] = 0.0
        acc_ref[1] = 0.0

    logits = (jnp.dot(hid_ref[...].astype(jnp.bfloat16), wlm_ref[...],
                      preferred_element_type=jnp.float32)
              + blm_ref[...])                                     # (rows, Vp)
    logits_ref[...] = logits

    # Fused cross entropy on the in-register tile (padded vocab cols masked out).
    tgt = tgt_ref[0]                                              # (tt, bp)
    lz = logits.reshape(tt, bp, Vp)                               # layout-preserving
    col = lax.broadcasted_iota(jnp.int32, (tt, bp, Vp), 2)
    lz = jnp.where(col < V, lz, jnp.float32(-1e30))
    m = jnp.max(lz, axis=-1, keepdims=True)
    lse = m + jnp.log(jnp.sum(jnp.exp(lz - m), axis=-1, keepdims=True))
    picked = jnp.sum(jnp.where(col == tgt[..., None], lz, 0.0),
                     axis=-1, keepdims=True)
    valid = (tgt >= 0).astype(jnp.float32)[..., None]
    acc_ref[0] += jnp.sum(valid * (lse - picked))
    acc_ref[1] += jnp.sum(valid)

    @pl.when(i == pl.num_programs(0) - 1)
    def _finalize():
        # NaN when no target is valid (matches torch F.cross_entropy).
        loss_ref[...] = (acc_ref[0] / acc_ref[1]).reshape(1, 1)


# ----------------------------------- wrapper -------------------------------------
def rnn_forward(idx, params, targets=None, *, t_tile=None):
    """Pallas equivalent of RNN.forward(idx, targets) with cell_type='rnn'."""
    wte = jnp.asarray(params["wte"], jnp.float32)      # (V, E)
    start = jnp.asarray(params["start"], jnp.float32)  # (1, H)
    w_xh = jnp.asarray(params["w_xh"], jnp.float32)    # (H, E+H)  torch Linear weight
    b_xh = jnp.asarray(params["b_xh"], jnp.float32)    # (H,)
    w_lm = jnp.asarray(params["w_lm"], jnp.float32)    # (V, H)
    b_lm = jnp.asarray(params["b_lm"], jnp.float32)    # (V,)

    B, T = idx.shape
    V, E = wte.shape
    H = start.shape[1]

    B_pad = _round_up(max(B, 8), 8)       # sublane-aligned per-step slices
    Hp = _round_up(max(H, 128), 128)      # lane-dense hidden
    Ep = _round_up(max(E, 128), 128)      # lane-dense embedding
    Vp = _round_up(max(V, 128), 128)      # lane-dense logits

    if t_tile is None:
        t_tile = _pick_t_tile(T, B_pad, Vp)
    if T % t_tile != 0:
        raise ValueError(f"t_tile={t_tile} must divide T={T}")
    n_tiles = T // t_tile
    rows = t_tile * B_pad                 # rows per tile (multiple of 8)
    Np = T * B_pad

    # ---- weight prep: transpose, zero-pad; big-matmul operands in bf16 ----
    bf16 = jnp.bfloat16
    wte_p = jnp.zeros((Vp, Ep), bf16).at[:V, :E].set(wte.astype(bf16))
    wx = jnp.zeros((Ep, Hp), bf16).at[:E, :H].set(w_xh[:, :E].T.astype(bf16))
    wh = jnp.zeros((Hp, Hp), jnp.float32).at[:H, :H].set(w_xh[:, E:].T)
    bxh = jnp.zeros((1, Hp), jnp.float32).at[:, :H].set(b_xh.reshape(1, H))
    start_p = jnp.zeros((1, Hp), jnp.float32).at[:, :H].set(start)
    wlm = jnp.zeros((Hp, Vp), bf16).at[:H, :V].set(w_lm.T.astype(bf16))
    blm = jnp.zeros((1, Vp), jnp.float32).at[:, :V].set(b_lm.reshape(1, V))

    # token ids: T-major, batch-padded, pre-tiled to (n_tiles, t_tile, B_pad)
    idx_tb = jnp.zeros((T, B_pad), jnp.int32).at[:, :B].set(idx.T.astype(jnp.int32))
    idx3 = idx_tb.reshape(n_tiles, t_tile, B_pad)

    def _resident(shape):
        zeros = (0,) * len(shape)
        return pl.BlockSpec(shape, lambda i, _z=zeros: _z)

    row_spec = pl.BlockSpec((rows, Hp), lambda i: (i, 0))
    id_spec = pl.BlockSpec((1, t_tile, B_pad), lambda i: (i, 0, 0))
    logits_spec = pl.BlockSpec((rows, Vp), lambda i: (i, 0))

    # ---- K1: embedding + input projection (token-tiled, parallel) ----
    est1 = (2 * (t_tile * 128 * 4 + rows * Hp * 4)
            + Vp * Ep * 2 + Ep * Hp * 2 + Hp * 4)
    xproj = pl.pallas_call(
        _embed_xproj_kernel,
        out_shape=jax.ShapeDtypeStruct((Np, Hp), jnp.float32),
        grid=(n_tiles,),
        in_specs=[id_spec, _resident((Vp, Ep)), _resident((Ep, Hp)),
                  _resident((1, Hp))],
        out_specs=row_spec,
        compiler_params=_compiler_params(("parallel",), est1),
    )(idx3, wte_p, wx, bxh)

    # ---- K2: recurrence (the only inherently serial part) ----
    est2 = 2 * Np * Hp * 4 + Hp * Hp * 4 + 2 * Hp * 4
    hid = pl.pallas_call(
        functools.partial(_recurrence_kernel, T=T, B_pad=B_pad),
        out_shape=jax.ShapeDtypeStruct((Np, Hp), jnp.float32),
        grid=(1,),
        in_specs=[_resident((Np, Hp)), _resident((Hp, Hp)), _resident((1, Hp))],
        out_specs=_resident((Np, Hp)),
        input_output_aliases={0: 0},          # reuse xproj's HBM buffer for hid
        compiler_params=_compiler_params(("arbitrary",), est2),
    )(xproj, wh, start_p)

    # ---- K3: lm_head (+ fused CE) over token tiles ----
    est3 = (2 * (rows * Hp * 4 + rows * Vp * 4 + t_tile * 128 * 4)
            + Hp * Vp * 2 + Vp * 4)
    if targets is None:
        logits_pad = pl.pallas_call(
            _head_kernel,
            out_shape=jax.ShapeDtypeStruct((Np, Vp), jnp.float32),
            grid=(n_tiles,),
            in_specs=[row_spec, _resident((Hp, Vp)), _resident((1, Vp))],
            out_specs=logits_spec,
            compiler_params=_compiler_params(("parallel",), est3),
        )(hid, wlm, blm)
        loss = None
    else:
        tgt_tb = jnp.full((T, B_pad), -1, jnp.int32).at[:, :B].set(
            targets.T.astype(jnp.int32))
        tgt3 = tgt_tb.reshape(n_tiles, t_tile, B_pad)
        # CE accumulates across tiles -> this grid axis is a reduction, so it must
        # be "arbitrary" (the inference head above stays "parallel" for megacore).
        logits_pad, loss_arr = pl.pallas_call(
            functools.partial(_head_ce_kernel, V=V),
            out_shape=(jax.ShapeDtypeStruct((Np, Vp), jnp.float32),
                       jax.ShapeDtypeStruct((1, 1), jnp.float32)),
            grid=(n_tiles,),
            in_specs=[row_spec, id_spec, _resident((Hp, Vp)), _resident((1, Vp))],
            out_specs=(logits_spec, pl.BlockSpec((1, 1), lambda i: (0, 0))),
            scratch_shapes=[pltpu.SMEM((2,), jnp.float32)],
            compiler_params=_compiler_params(("arbitrary",), est3),
        )(hid, tgt3, wlm, blm)
        loss = loss_arr[0, 0]

    # (T*B_pad, Vp) -> (B, T, V)
    logits = logits_pad.reshape(T, B_pad, Vp)[:, :B, :V].transpose(1, 0, 2)
    return logits, loss


if __name__ == "__main__":
    # config: vocab_size=32, n_embd=16, n_embd2=32, block_size=8, batch=2
    V, E, H = 32, 16, 32
    B, T = 2, 8

    key = jax.random.PRNGKey(0)
    ks = jax.random.split(key, 7)
    params = {
        "wte":   (0.1 * jax.random.normal(ks[0], (V, E))).astype(jnp.float32),
        "start": (0.1 * jax.random.normal(ks[1], (1, H))).astype(jnp.float32),
        "w_xh":  (0.1 * jax.random.normal(ks[2], (H, E + H))).astype(jnp.float32),
        "b_xh":  (0.1 * jax.random.normal(ks[3], (H,))).astype(jnp.float32),
        "w_lm":  (0.1 * jax.random.normal(ks[4], (V, H))).astype(jnp.float32),
        "b_lm":  (0.1 * jax.random.normal(ks[5], (V,))).astype(jnp.float32),
    }
    idx = jax.random.randint(ks[6], (B, T), 0, V, dtype=jnp.int32)
    targets = jax.random.randint(jax.random.PRNGKey(1), (B, T), 0, V, dtype=jnp.int32)
    targets = targets.at[0, 0].set(-1)            # exercise ignore_index=-1

    # training path, forced multi-tile (t_tile=2 -> 4 embed/head tiles)
    logits, loss = rnn_forward(idx, params, targets, t_tile=2)
    jax.block_until_ready((logits, loss))

    # --- float64 numpy reference (mirrors RNN.forward with RNNCell) ---
    wte_np = np.asarray(params["wte"], np.float64)
    start_np = np.asarray(params["start"], np.float64)
    w_xh_np = np.asarray(params["w_xh"], np.float64)
    b_xh_np = np.asarray(params["b_xh"], np.float64)
    w_lm_np = np.asarray(params["w_lm"], np.float64)
    b_lm_np = np.asarray(params["b_lm"], np.float64)
    idx_np = np.asarray(idx)
    tgt_np = np.asarray(targets)

    emb = wte_np[idx_np]                                    # (B, T, E)
    h = np.broadcast_to(start_np, (B, H)).copy()
    hs = []
    for t in range(T):
        xh = np.concatenate([emb[:, t, :], h], axis=1)
        h = np.tanh(xh @ w_xh_np.T + b_xh_np)
        hs.append(h)
    hidden = np.stack(hs, axis=1)                           # (B, T, H)
    ref_logits = hidden @ w_lm_np.T + b_lm_np               # (B, T, V)

    flat = ref_logits.reshape(-1, V)
    mx = flat.max(axis=-1, keepdims=True)
    lse = mx[:, 0] + np.log(np.exp(flat - mx).sum(axis=-1))
    tgt_flat = tgt_np.reshape(-1)
    valid = tgt_flat >= 0
    picked = flat[np.arange(B * T), np.where(valid, tgt_flat, 0)]
    ref_loss = float(((lse - picked) * valid).sum() / valid.sum())

    # bf16 MXU inputs (f32 accumulation) => relaxed tolerance vs the f64 reference.
    np.testing.assert_allclose(np.asarray(logits), ref_logits, rtol=2e-2, atol=1e-2)
    np.testing.assert_allclose(float(loss), ref_loss, rtol=1e-2, atol=1e-2)

    # inference path (default tiling, no CE epilogue, "parallel" head)
    logits2, loss2 = rnn_forward(idx, params, None)
    jax.block_until_ready(logits2)
    assert loss2 is None
    np.testing.assert_allclose(np.asarray(logits2), ref_logits, rtol=2e-2, atol=1e-2)

    print("KERNEL_OK")
</pallas_src>

<mosaic_0001>
module attributes {stable_mosaic.version = 11 : i64} {
  func.func @_embed_xproj_kernel(%arg0: i32, %arg1: memref<1x2x8xi32, #tpu.memory_space<vmem>>, %arg2: memref<128x128xbf16, #tpu.memory_space<vmem>>, %arg3: memref<128x128xbf16, #tpu.memory_space<vmem>>, %arg4: memref<1x128xf32, #tpu.memory_space<vmem>>, %arg5: memref<16x128xf32, #tpu.memory_space<vmem>>) attributes {dimension_semantics = [#tpu.dimension_semantics<parallel>], iteration_bounds = array<i64: 4>, scalar_prefetch = 0 : i64, scratch_operands = 0 : i64, tpu.core_type = #tpu.core_type<tc>, window_params = [{transform_indices = @transform_0, window_bounds = array<i64: 1, 2, 8>}, {pipeline_mode = #tpu.pipeline_mode<synchronous>, transform_indices = @transform_1, window_bounds = array<i64: 128, 128>}, {pipeline_mode = #tpu.pipeline_mode<synchronous>, transform_indices = @transform_2, window_bounds = array<i64: 128, 128>}, {pipeline_mode = #tpu.pipeline_mode<synchronous>, transform_indices = @transform_3, window_bounds = array<i64: 1, 128>}, {transform_indices = @transform_4, window_bounds = array<i64: 16, 128>}]} {
    %c0 = arith.constant 0 : index
    %c0_0 = arith.constant 0 : index
    %c0_1 = arith.constant 0 : index
    %0 = vector.load %arg1[%c0, %c0_0, %c0_1] : memref<1x2x8xi32, #tpu.memory_space<vmem>>, vector<1x2x8xi32>
    %1 = vector.shape_cast %0 : vector<1x2x8xi32> to vector<2x8xi32>
    %2 = tpu.iota {dimensions = array<i32: 2>} : vector<2x8x128xi32>
    %3 = vector.shape_cast %1 : vector<2x8xi32> to vector<2x8x1xi32>
    %4 = vector.broadcast %3 : vector<2x8x1xi32> to vector<2x8x128xi32>
    %5 = arith.cmpi eq, %2, %4 : vector<2x8x128xi32>
    %6 = arith.extui %5 : vector<2x8x128xi1> to vector<2x8x128xi32>
    %7 = arith.sitofp %6 : vector<2x8x128xi32> to vector<2x8x128xf32>
    %8 = vector.shape_cast %7 : vector<2x8x128xf32> to vector<16x128xf32>
    %9 = arith.truncf %8 : vector<16x128xf32> to vector<16x128xbf16>
    %c0_2 = arith.constant 0 : index
    %c0_3 = arith.constant 0 : index
    %10 = vector.load %arg2[%c0_2, %c0_3] : memref<128x128xbf16, #tpu.memory_space<vmem>>, vector<128x128xbf16>
    %cst = arith.constant dense<0.000000e+00> : vector<16x128xf32>
    %11 = tpu.matmul %9, %10, %cst {dimension_numbers = #tpu.dot_dimension_numbers<[1], [0], [0], [1], [0, 0, 1, 1], [], []>} : vector<16x128xbf16>, vector<128x128xbf16>, vector<16x128xf32> -> vector<16x128xf32>
    %12 = arith.truncf %11 : vector<16x128xf32> to vector<16x128xbf16>
    %c0_4 = arith.constant 0 : index
    %c0_5 = arith.constant 0 : index
    %13 = vector.load %arg3[%c0_4, %c0_5] : memref<128x128xbf16, #tpu.memory_space<vmem>>, vector<128x128xbf16>
    %cst_6 = arith.constant dense<0.000000e+00> : vector<16x128xf32>
    %14 = tpu.matmul %12, %13, %cst_6 {dimension_numbers = #tpu.dot_dimension_numbers<[1], [0], [0], [1], [0, 0, 1, 1], [], []>} : vector<16x128xbf16>, vector<128x128xbf16>, vector<16x128xf32> -> vector<16x128xf32>
    %c0_7 = arith.constant 0 : index
    %c0_8 = arith.constant 0 : index
    %15 = vector.load %arg4[%c0_7, %c0_8] : memref<1x128xf32, #tpu.memory_space<vmem>>, vector<1x128xf32>
    %16 = vector.broadcast %15 : vector<1x128xf32> to vector<16x128xf32>
    %17 = arith.addf %14, %16 : vector<16x128xf32>
    %c0_9 = arith.constant 0 : index
    %c0_10 = arith.constant 0 : index
    %18 = vector.load %arg5[%c0_9, %c0_10] : memref<16x128xf32, #tpu.memory_space<vmem>>, vector<16x128xf32>
    tpu.vector_store %arg5[%c0_9, %c0_10], %17 {strides = array<i32>} : memref<16x128xf32, #tpu.memory_space<vmem>>, vector<16x128xf32>,
    return
  }
  func.func @transform_0(%arg0: i32) -> (i32, i32, i32) {
    %c0_i32 = arith.constant 0 : i32
    %c0_i32_0 = arith.constant 0 : i32
    %c0_i32_1 = arith.constant 0 : i32
    return %arg0, %c0_i32, %c0_i32_0 : i32, i32, i32
  }
  func.func @transform_1(%arg0: i32) -> (i32, i32) {
    %c0_i32 = arith.constant 0 : i32
    %c0_i32_0 = arith.constant 0 : i32
    %c0_i32_1 = arith.constant 0 : i32
    return %c0_i32, %c0_i32_0 : i32, i32
  }
  func.func @transform_2(%arg0: i32) -> (i32, i32) {
    %c0_i32 = arith.constant 0 : i32
    %c0_i32_0 = arith.constant 0 : i32
    %c0_i32_1 = arith.constant 0 : i32
    return %c0_i32, %c0_i32_0 : i32, i32
  }
  func.func @transform_3(%arg0: i32) -> (i32, i32) {
    %c0_i32 = arith.constant 0 : i32
    %c0_i32_0 = arith.constant 0 : i32
    %c0_i32_1 = arith.constant 0 : i32
    return %c0_i32, %c0_i32_0 : i32, i32
  }
  func.func @transform_4(%arg0: i32) -> (i32, i32) {
    %c0_i32 = arith.constant 0 : i32
    %c0_i32_0 = arith.constant 0 : i32
    return %arg0, %c0_i32 : i32, i32
  }
}

</mosaic_0001>

<llo_original>
// kernel: tpu_custom_call.1
$region0: #{tpu_custom_call.1}
  #allocation0 [shape = 'u32[]', space=smem, size = 0x4, offset = 0x4, fixed_abs, tag = 'smem constant byte address 0x4 - core index']
  #allocation1 [shape = 'u32[144,128]{1,0:T(1,128)}', space=vmem, size = 0x12000, scoped, tag = 'internal scratch']
  %s0 = inlined_call_operand.hbm [shape: s32[4,2,8], index: 0, kind: input, shape index: {}]
  %s1 = inlined_call_operand.hbm [shape: bf16[128,128], index: 1, kind: input, shape index: {}]
  %s2 = inlined_call_operand.hbm [shape: bf16[128,128], index: 2, kind: input, shape index: {}]
  %s3 = inlined_call_operand.vmem [shape: f32[1,128], index: 3, kind: input, shape index: {}]
  %s4 = inlined_call_operand.hbm [shape: f32[64,128], index: 4, kind: output, shape index: {}]
  %s5 = sld [smem:[#allocation0]]
  $region61: #{tpu_custom_call.1} parent=0
    _
  %s7 = ssub.s32 1, %s5
  %s8 = scalar_select 0, %s7, %s5
  $region1: #{tpu_custom_call.1} parent=0
    #allocation2 [shape = 'u8[2048]{0}', space=vmem, size = 0x800, scoped, tag = 'input window, operand 0']
    #allocation3 [shape = 's32[2]{0}', space=sflag, size = 0x8, scoped, tag = 'scoped memory for tpu_custom_call.1']
    #allocation4 [shape = 's32[2]{0}', space=sflag, size = 0x8, scoped, tag = 'scoped memory for tpu_custom_call.1']
    #allocation5 [shape = 'u8[32768]{0}', space=vmem, size = 0x8000, scoped, tag = 'input window, operand 1, single buffered']
    #allocation6 [shape = 's32[1]{0}', space=sflag, size = 0x4, scoped, tag = 'scoped memory for tpu_custom_call.1']
    #allocation7 [shape = 'u8[32768]{0}', space=vmem, size = 0x8000, scoped, tag = 'input window, operand 2, single buffered']
    #allocation8 [shape = 'u8[16384]{0}', space=vmem, size = 0x4000, scoped, tag = 'output window, operand 0']
    %9 = vsyncpa [#allocation3], 0
    %s10 = scalar_lea.sflag [#allocation3], 1
    %11 = vsyncpa %s10, 0
    %12 = vsyncpa [#allocation6], 0
    %13 = vsyncpa [#allocation4], 0
    %s14 = scalar_lea.sflag [#allocation4], 1
    %15 = vsyncpa %s14, 0
    loop: start=0, step=1, limit=6
    $region2: #{tpu_custom_call.1} parent=1 // loop_pre_header
      _
    $region3: #{tpu_custom_call.1} parent=1 // loop_header
      %s17 = sphi 0, %s21
      %p18 = scmp.ge.s32.totalorder %s17, 6
      %s27 = sphi 0, %s29
      %s30 = sphi 0, %s27
      %s31 = sphi 0, %s30
      %s47 = sphi 0, %s31
      %s51 = sphi 0, %s51
      %s53 = sphi 0, %s51
      %s54 = sphi 0, %s53
      %s68 = sphi 0, %s54
      %s72 = sphi 0, %s72
      %s74 = sphi 0, %s72
      %s75 = sphi 0, %s74
      %s89 = sphi 0, %s75
      %s93 = sphi 0, %s93
      %s95 = sphi 0, %s93
      %s96 = sphi 0, %s95
      %s110 = sphi 0, %s96
      %s116 = sphi 0, %s118
      %s119 = sphi 0, %s116
      %s120 = sphi 0, %s119
      %s136 = sphi 0, %s120
    $region4: #{tpu_custom_call.1} parent=1 // loop_header_branch
      %20 = sbr.rel (%p18) target = $region8
    $region5: #{tpu_custom_call.1} parent=1 // loop_body
      %s22 = ssub.s32 %s17, 1
      %s23 = ssub.s32 %s17, 2
      %s24 = sadd.s32 %s17, 1
      %s25 = ssub.s32 %s17, %s24
      %p26 = scmp.eq.s32.totalorder %s25, 0
      %s28 = sadd.s32 %s27, 1
      %s29 = scalar_select %p26, %s27, %s28
      %p32 = pneg %p26
      %p33 = scmp.eq.s32.totalorder %s17, 3
      %p34 = por %p32, %p33
      %p35 = scmp.ne.s32.totalorder %s27, %s30
      %p36 = scmp.eq.s32.totalorder %s17, 0
      %p37 = por %p35, %p36
      %p38 = scmp.ne.s32.totalorder %s27, %s30
      %p39 = scmp.eq.s32.totalorder %s22, 3
      %p40 = por %p38, %p39
      %p41 = scmp.ne.s32.totalorder %s30, %s31
      %p42 = scmp.eq.s32.totalorder %s22, 0
      %p43 = por %p41, %p42
      %p44 = scmp.ne.s32.totalorder %s30, %s31
      %p45 = scmp.eq.s32.totalorder %s23, 3
      %p46 = por %p44, %p45
      %p48 = scmp.ne.s32.totalorder %s31, %s47
      %p49 = scmp.eq.s32.totalorder %s23, 0
      %p50 = por %p48, %p49
      %s52 = sadd.s32 %s51, 1
      %p55 = scmp.eq.s32.totalorder %s17, 3
      %p56 = scmp.ne.s32.totalorder %s51, %s53
      %p57 = scmp.eq.s32.totalorder %s17, 0
      %p58 = por %p56, %p57
      %p59 = scmp.ne.s32.totalorder %s51, %s53
      %p60 = scmp.eq.s32.totalorder %s22, 3
      %p61 = por %p59, %p60
      %p62 = scmp.ne.s32.totalorder %s53, %s54
      %p63 = scmp.eq.s32.totalorder %s22, 0
      %p64 = por %p62, %p63
      %p65 = scmp.ne.s32.totalorder %s53, %s54
      %p66 = scmp.eq.s32.totalorder %s23, 3
      %p67 = por %p65, %p66
      %p69 = scmp.ne.s32.totalorder %s54, %s68
      %p70 = scmp.eq.s32.totalorder %s23, 0
      %p71 = por %p69, %p70
      %s73 = sadd.s32 %s72, 1
      %p76 = scmp.eq.s32.totalorder %s17, 3
      %p77 = scmp.ne.s32.totalorder %s72, %s74
      %p78 = scmp.eq.s32.totalorder %s17, 0
      %p79 = por %p77, %p78
      %p80 = scmp.ne.s32.totalorder %s72, %s74
      %p81 = scmp.eq.s32.totalorder %s22, 3
      %p82 = por %p80, %p81
      %p83 = scmp.ne.s32.totalorder %s74, %s75
      %p84 = scmp.eq.s32.totalorder %s22, 0
      %p85 = por %p83, %p84
      %p86 = scmp.ne.s32.totalorder %s74, %s75
      %p87 = scmp.eq.s32.totalorder %s23, 3
      %p88 = por %p86, %p87
      %p90 = scmp.ne.s32.totalorder %s75, %s89
      %p91 = scmp.eq.s32.totalorder %s23, 0
      %p92 = por %p90, %p91
      %s94 = sadd.s32 %s93, 1
      %p97 = scmp.eq.s32.totalorder %s17, 3
      %p98 = scmp.ne.s32.totalorder %s93, %s95
      %p99 = scmp.eq.s32.totalorder %s17, 0
      %p100 = por %p98, %p99
      %p101 = scmp.ne.s32.totalorder %s93, %s95
      %p102 = scmp.eq.s32.totalorder %s22, 3
      %p103 = por %p101, %p102
      %p104 = scmp.ne.s32.totalorder %s95, %s96
      %p105 = scmp.eq.s32.totalorder %s22, 0
      %p106 = por %p104, %p105
      %p107 = scmp.ne.s32.totalorder %s95, %s96
      %p108 = scmp.eq.s32.totalorder %s23, 3
      %p109 = por %p107, %p108
      %p111 = scmp.ne.s32.totalorder %s96, %s110
      %p112 = scmp.eq.s32.totalorder %s23, 0
      %p113 = por %p111, %p112
      %s114 = ssub.s32 %s17, %s24
      %p115 = scmp.eq.s32.totalorder %s114, 0
      %s117 = sadd.s32 %s116, 1
      %s118 = scalar_select %p115, %s116, %s117
      %p121 = pneg %p115
      %p122 = scmp.eq.s32.totalorder %s17, 3
      %p123 = por %p121, %p122
      %p124 = scmp.ne.s32.totalorder %s116, %s119
      %p125 = scmp.eq.s32.totalorder %s17, 0
      %p126 = por %p124, %p125
      %p127 = scmp.ne.s32.totalorder %s116, %s119
      %p128 = scmp.eq.s32.totalorder %s22, 3
      %p129 = por %p127, %p128
      %p130 = scmp.ne.s32.totalorder %s119, %s120
      %p131 = scmp.eq.s32.totalorder %s22, 0
      %p132 = por %p130, %p131
      %p133 = scmp.ne.s32.totalorder %s119, %s120
      %p134 = scmp.eq.s32.totalorder %s23, 3
      %p135 = por %p133, %p134
      %p137 = scmp.ne.s32.totalorder %s120, %s136
      %p138 = scmp.eq.s32.totalorder %s23, 0
      %p139 = por %p137, %p138
      %p140 = scmp.le.s32.totalorder 1, %s17
      %p141 = scmp.lt.s32.totalorder %s17, 5
      %p142 = pnand %p140, %p141
      %p143 = pneg %p142
      // Predicated region
      $region9: #{tpu_custom_call.1} parent=5 // pred_check
        _
      $region10: #{tpu_custom_call.1} parent=5 // pred_check_branch
        %145 = sbr.rel (%p142) target = $region12
      $region11: #{tpu_custom_call.1} parent=5 // pred_region
        %s146 = ssub.s32 %s17, 1
        // Predicated region
        $region13: #{tpu_custom_call.1} parent=11 // pred_check
          %p147 = pneg %p64
        $region14: #{tpu_custom_call.1} parent=11 // pred_check_branch
          %149 = sbr.rel (%p147) target = $region16
        $region15: #{tpu_custom_call.1} parent=11 // pred_region
          %s151 = ssub.s32 1024, 1024
          %152 = vsyncadd [#allocation6], %s151
          %s153 = sshll.u32 [#allocation5], 4
          %s154 = int_to_ptr.vmem [resolvable:$true] %s153
          %159 = dma.hbm_to_vmem [thread:$0]  %s1, 1024, %s154, [#allocation6], 64, 64, 4
        $region16: #{tpu_custom_call.1} parent=11 // pred_fallthru
          _
        // Predicated region
        $region17: #{tpu_custom_call.1} parent=11 // pred_check
          %p160 = pneg %p85
        $region18: #{tpu_custom_call.1} parent=11 // pred_check_branch
          %162 = sbr.rel (%p160) target = $region20
        $region19: #{tpu_custom_call.1} parent=11 // pred_region
          %s164 = ssub.s32 1024, 1024
          %165 = vsyncadd [#allocation6], %s164
          %s166 = sshll.u32 [#allocation7], 4
          %s167 = int_to_ptr.vmem [resolvable:$true] %s166
          %172 = dma.hbm_to_vmem [thread:$0]  %s2, 1024, %s167, [#allocation6], 64, 64, 4
        $region20: #{tpu_custom_call.1} parent=11 // pred_fallthru
          _
        // Predicated region
        $region21: #{tpu_custom_call.1} parent=11 // pred_check
          %p173 = pneg %p106
        $region22: #{tpu_custom_call.1} parent=11 // pred_check_branch
          %175 = sbr.rel (%p173) target = $region24
        $region23: #{tpu_custom_call.1} parent=11 // pred_region
          _
        $region24: #{tpu_custom_call.1} parent=11 // pred_fallthru
          _
      $region12: #{tpu_custom_call.1} parent=5 // pred_fallthru
        _
      %p176 = scmp.lt.s32.totalorder %s17, 4
      // Predicated region
      $region25: #{tpu_custom_call.1} parent=5 // pred_check
        %p177 = pneg %p176
      $region26: #{tpu_custom_call.1} parent=5 // pred_check_branch
        %179 = sbr.rel (%p177) target = $region28
      $region27: #{tpu_custom_call.1} parent=5 // pred_region
        // Predicated region
        $region29: #{tpu_custom_call.1} parent=27 // pred_check
          %p180 = pneg %p37
        $region30: #{tpu_custom_call.1} parent=27 // pred_check_branch
          %182 = sbr.rel (%p180) target = $region32
        $region31: #{tpu_custom_call.1} parent=27 // pred_region
          %s183 = sand.u32 %s27, 1
          %s184 = scalar_lea.sflag [#allocation3], %s183
          %s185 = sand.u32 %s27, 1
          %s186 = smul.addr %s185, 2
          %s187 = scalar_lea.vmem [#allocation2], %s186
          %s189 = ssub.s32 32, 32
          %190 = vsyncadd %s184, %s189
          %s191 = smul.addr %s17, 32
          %s192 = scalar_lea.hbm %s0, %s191
          %s194 = sshll.u32 %s187, 4
          %s195 = int_to_ptr.vmem [resolvable:$true] %s194
          %197 = dma.hbm_to_vmem [thread:$0]  %s192, 32, %s195, %s184
        $region32: #{tpu_custom_call.1} parent=27 // pred_fallthru
          _
      $region28: #{tpu_custom_call.1} parent=5 // pred_fallthru
        _
      %p198 = scmp.le.s32.totalorder 1, %s17
      %p199 = scmp.lt.s32.totalorder %s17, 5
      %p200 = pnand %p198, %p199
      %p201 = pneg %p200
      // Predicated region
      $region33: #{tpu_custom_call.1} parent=5 // pred_check
        _
      $region34: #{tpu_custom_call.1} parent=5 // pred_check_branch
        %203 = sbr.rel (%p200) target = $region36
      $region35: #{tpu_custom_call.1} parent=5 // pred_region
        %s204 = ssub.s32 %s17, 1
        %s205 = sand.u32 %s30, 1
        %s206 = scalar_lea.sflag [#allocation3], %s205
        %s207 = sand.u32 %s30, 1
        %s208 = smul.addr %s207, 2
        %s209 = scalar_lea.vmem [#allocation2], %s208
        // Predicated region
        $region37: #{tpu_custom_call.1} parent=35 // pred_check
          %p210 = pneg %p43
        $region38: #{tpu_custom_call.1} parent=35 // pred_check_branch
          %212 = sbr.rel (%p210) target = $region40
        $region39: #{tpu_custom_call.1} parent=35 // pred_region
          %213 = dma.done %s206, 32
        $region40: #{tpu_custom_call.1} parent=35 // pred_fallthru
          _
        // Predicated region
        $region41: #{tpu_custom_call.1} parent=35 // pred_check
          %p214 = pneg %p64
        $region42: #{tpu_custom_call.1} parent=35 // pred_check_branch
          %216 = sbr.rel (%p214) target = $region44
        $region43: #{tpu_custom_call.1} parent=35 // pred_region
          %217 = dma.done [#allocation6], 1024
        $region44: #{tpu_custom_call.1} parent=35 // pred_fallthru
          _
        // Predicated region
        $region45: #{tpu_custom_call.1} parent=35 // pred_check
          %p218 = pneg %p85
        $region46: #{tpu_custom_call.1} parent=35 // pred_check_branch
          %220 = sbr.rel (%p218) target = $region48
        $region47: #{tpu_custom_call.1} parent=35 // pred_region
          %221 = dma.done [#allocation6], 1024
        $region48: #{tpu_custom_call.1} parent=35 // pred_fallthru
          _
        %s222 = sand.u32 %s30, 1
        %s223 = scalar_lea.sflag [#allocation3], %s222
        %s224 = sand.u32 %s30, 1
        %s225 = smul.addr %s224, 2
        %s226 = scalar_lea.vmem [#allocation2], %s225
        %p227 = pneg %p43
        %p228 = pneg %p40
        %p229 = pneg %p64
        %p230 = pneg %p61
        %p231 = pneg %p85
        %p232 = pneg %p82
        %p233 = pneg %p106
        %p234 = pneg %p103
        %p235 = pneg %p132
        %p236 = pneg %p129
        %s237 = sand.u32 %s119, 1
        %s238 = scalar_lea.sflag [#allocation4], %s237
        %s239 = sand.u32 %s119, 1
        %s240 = smul.addr %s239, 16
        %s241 = scalar_lea.vmem [#allocation8], %s240
        %s242 = smul.u32 2, %s22
        %v244 = vld [vmem:[%s209] sm:$0x3]
        %v245 = vlaneseq
        %v246 = vand.u32 %v245, 127
        %v247 = vlaneseq
        %v248 = vshrl.u32 %v247, 7
        %v249 = vsub.s32 0, %v248
        %v250 = vrot.slane %v244, %v249
        %252 = vbcast.lane.b32.xlu0 %v250, 256
        %v253 = vpop.permute.xlu0 %252
        %v254 = vlaneseq
        %v255 = vshrl.u32 %v254, 7
        %v256 = vsub.s32 1, %v255
        %v257 = vrot.slane %v244, %v256
        %259 = vbcast.lane.b32.xlu0 %v257, 256
        %v260 = vpop.permute.xlu0 %259
        %vm261 = vcmp.eq.s32.totalorder %v246, %v253
        %vm262 = vcmp.eq.s32.totalorder %v246, %v260
        %v263 = vsel %vm261, 1, 0
        %v264 = vsel %vm262, 1, 0
        %v265 = vcvt.s32.f32 %v263
        %v266 = vcvt.s32.f32 %v264
        %v267 = vpack.c.bf16 %v266, %v265
        %v268 = vld [vmem:[#allocation5] sm:$0xf]
        %v269 = vld [vmem:[#allocation5 + $0x4] sm:$0xf]
        %v270 = vld [vmem:[#allocation5 + $0x8] sm:$0xf]
        %v271 = vld [vmem:[#allocation5 + $0xc] sm:$0xf]
        %v272 = vld [vmem:[#allocation5 + $0x10] sm:$0xf]
        %v273 = vld [vmem:[#allocation5 + $0x14] sm:$0xf]
        %v274 = vld [vmem:[#allocation5 + $0x18] sm:$0xf]
        %v275 = vld [vmem:[#allocation5 + $0x1c] sm:$0xf]
        %v276 = vld [vmem:[#allocation5 + $0x20] sm:$0xf]
        %v277 = vld [vmem:[#allocation5 + $0x24] sm:$0xf]
        %v278 = vld [vmem:[#allocation5 + $0x28] sm:$0xf]
        %v279 = vld [vmem:[#allocation5 + $0x2c] sm:$0xf]
        %v280 = vld [vmem:[#allocation5 + $0x30] sm:$0xf]
        %v281 = vld [vmem:[#allocation5 + $0x34] sm:$0xf]
        %v282 = vld [vmem:[#allocation5 + $0x38] sm:$0xf]
        %v283 = vld [vmem:[#allocation5 + $0x3c] sm:$0xf]
        %v300 = vunpack.c.l.b16 %v268
        %v301 = vunpack.c.l.b16 %v269
        %v302 = vunpack.c.l.b16 %v270
        %v303 = vunpack.c.l.b16 %v271
        %v304 = vunpack.c.l.b16 %v272
        %v305 = vunpack.c.l.b16 %v273
        %v306 = vunpack.c.l.b16 %v274
        %v307 = vunpack.c.l.b16 %v275
        %v308 = vunpack.c.l.b16 %v276
        %v309 = vunpack.c.l.b16 %v277
        %v310 = vunpack.c.l.b16 %v278
        %v311 = vunpack.c.l.b16 %v279
        %v312 = vunpack.c.l.b16 %v280
        %v313 = vunpack.c.l.b16 %v281
        %v314 = vunpack.c.l.b16 %v282
        %v315 = vunpack.c.l.b16 %v283
        %v316 = vpack.c.b16 %v301, %v300
        %v317 = vpack.c.b16 %v303, %v302
        %v318 = vpack.c.b16 %v305, %v304
        %v319 = vpack.c.b16 %v307, %v306
        %v320 = vpack.c.b16 %v309, %v308
        %v321 = vpack.c.b16 %v311, %v310
        %v322 = vpack.c.b16 %v313, %v312
        %v323 = vpack.c.b16 %v315, %v314
        %332 = vmatprep.subr.bf16.mxu0 0
        %333 = vmatpush1.bf16.msra.mxu0 %v316
        %334 = vmatprep.subr.bf16.mxu0 0
        %335 = vmatpush1.bf16.msra.mxu0 %v317
        %336 = vmatprep.subr.bf16.mxu0 0
        %337 = vmatpush1.bf16.msra.mxu0 %v318
        %338 = vmatprep.subr.bf16.mxu0 0
        %339 = vmatpush1.bf16.msra.mxu0 %v319
        %340 = vmatprep.subr.bf16.mxu0 0
        %341 = vmatpush1.bf16.msra.mxu0 %v320
        %342 = vmatprep.subr.bf16.mxu0 0
        %343 = vmatpush1.bf16.msra.mxu0 %v321
        %344 = vmatprep.subr.bf16.mxu0 0
        %345 = vmatpush1.bf16.msra.mxu0 %v322
        %346 = vmatprep.subr.bf16.mxu0 0
        %347 = vmatpush1.bf16.msra.mxu0 %v323
        %348 = vmatprep.subr.bf16.mxu0 0
        %349 = vmatpush1.bf16.msra.mxu0 0
        %350 = vmatprep.subr.bf16.mxu0 0
        %351 = vmatpush1.bf16.msra.mxu0 0
        %352 = vmatprep.subr.bf16.mxu0 0
        %353 = vmatpush1.bf16.msra.mxu0 0
        %354 = vmatprep.subr.bf16.mxu0 0
        %355 = vmatpush1.bf16.msra.mxu0 0
        %356 = vmatprep.subr.bf16.mxu0 0
        %357 = vmatpush1.bf16.msra.mxu0 0
        %358 = vmatprep.subr.bf16.mxu0 0
        %359 = vmatpush1.bf16.msra.mxu0 0
        %360 = vmatprep.subr.bf16.mxu0 0
        %361 = vmatpush1.bf16.msra.mxu0 0
        %362 = vmatprep.subr.bf16.mxu0 0
        %363 = vmatpush1.bf16.msra.mxu0 0
        %364 = vmatprep.mubr.bf16.mxu0 0
        %365 = vmatmul.mubr.bf16.gmra.mrb[0].mxu0 %v267
        %v366 = vpop.f32.mrb[0].mxu0
        %v367 = vadd.f32 0.0, %v366
        %v368 = vpop.f32.mrb[0].mxu0
        %v369 = vpop.f32.mrb[0].mxu0
        %v370 = vadd.f32 0.0, %v369
        %v371 = vpop.f32.mrb[0].mxu0
        %372 = vdwg.mxu0
        %v373 = vpack.c.bf16 %v370, %v367
        %v374 = vld [vmem:[#allocation7] sm:$0xf]
        %v375 = vld [vmem:[#allocation7 + $0x4] sm:$0xf]
        %v376 = vld [vmem:[#allocation7 + $0x8] sm:$0xf]
        %v377 = vld [vmem:[#allocation7 + $0xc] sm:$0xf]
        %v378 = vld [vmem:[#allocation7 + $0x10] sm:$0xf]
        %v379 = vld [vmem:[#allocation7 + $0x14] sm:$0xf]
        %v380 = vld [vmem:[#allocation7 + $0x18] sm:$0xf]
        %v381 = vld [vmem:[#allocation7 + $0x1c] sm:$0xf]
        %v382 = vld [vmem:[#allocation7 + $0x20] sm:$0xf]
        %v383 = vld [vmem:[#allocation7 + $0x24] sm:$0xf]
        %v384 = vld [vmem:[#allocation7 + $0x28] sm:$0xf]
        %v385 = vld [vmem:[#allocation7 + $0x2c] sm:$0xf]
        %v386 = vld [vmem:[#allocation7 + $0x30] sm:$0xf]
        %v387 = vld [vmem:[#allocation7 + $0x34] sm:$0xf]
        %v388 = vld [vmem:[#allocation7 + $0x38] sm:$0xf]
        %v389 = vld [vmem:[#allocation7 + $0x3c] sm:$0xf]
        %v390 = vld [vmem:[%s3] sm:$0x1]
        %v392 = vlaneseq
        %v393 = vshrl.u32 %v392, 7
        %v394 = vsub.s32 0, %v393
        %v395 = vrot.slane %v390, %v394
        %v413 = vunpack.c.l.b16 %v374
        %v414 = vunpack.c.l.b16 %v375
        %v415 = vunpack.c.l.b16 %v376
        %v416 = vunpack.c.l.b16 %v377
        %v417 = vunpack.c.l.b16 %v378
        %v418 = vunpack.c.l.b16 %v379
        %v419 = vunpack.c.l.b16 %v380
        %v420 = vunpack.c.l.b16 %v381
        %v421 = vunpack.c.l.b16 %v382
        %v422 = vunpack.c.l.b16 %v383
        %v423 = vunpack.c.l.b16 %v384
        %v424 = vunpack.c.l.b16 %v385
        %v425 = vunpack.c.l.b16 %v386
        %v426 = vunpack.c.l.b16 %v387
        %v427 = vunpack.c.l.b16 %v388
        %v428 = vunpack.c.l.b16 %v389
        %v429 = vpack.c.b16 %v414, %v413
        %v430 = vpack.c.b16 %v416, %v415
        %v431 = vpack.c.b16 %v418, %v417
        %v432 = vpack.c.b16 %v420, %v419
        %v433 = vpack.c.b16 %v422, %v421
        %v434 = vpack.c.b16 %v424, %v423
        %v435 = vpack.c.b16 %v426, %v425
        %v436 = vpack.c.b16 %v428, %v427
        %445 = vmatprep.subr.bf16.mxu0 0
        %446 = vmatpush1.bf16.msra.mxu0 %v429
        %447 = vmatprep.subr.bf16.mxu0 0
        %448 = vmatpush1.bf16.msra.mxu0 %v430
        %449 = vmatprep.subr.bf16.mxu0 0
        %450 = vmatpush1.bf16.msra.mxu0 %v431
        %451 = vmatprep.subr.bf16.mxu0 0
        %452 = vmatpush1.bf16.msra.mxu0 %v432
        %453 = vmatprep.subr.bf16.mxu0 0
        %454 = vmatpush1.bf16.msra.mxu0 %v433
        %455 = vmatprep.subr.bf16.mxu0 0
        %456 = vmatpush1.bf16.msra.mxu0 %v434
        %457 = vmatprep.subr.bf16.mxu0 0
        %458 = vmatpush1.bf16.msra.mxu0 %v435
        %459 = vmatprep.subr.bf16.mxu0 0
        %460 = vmatpush1.bf16.msra.mxu0 %v436
        %461 = vmatprep.subr.bf16.mxu0 0
        %462 = vmatpush1.bf16.msra.mxu0 0
        %463 = vmatprep.subr.bf16.mxu0 0
        %464 = vmatpush1.bf16.msra.mxu0 0
        %465 = vmatprep.subr.bf16.mxu0 0
        %466 = vmatpush1.bf16.msra.mxu0 0
        %467 = vmatprep.subr.bf16.mxu0 0
        %468 = vmatpush1.bf16.msra.mxu0 0
        %469 = vmatprep.subr.bf16.mxu0 0
        %470 = vmatpush1.bf16.msra.mxu0 0
        %471 = vmatprep.subr.bf16.mxu0 0
        %472 = vmatpush1.bf16.msra.mxu0 0
        %473 = vmatprep.subr.bf16.mxu0 0
        %474 = vmatpush1.bf16.msra.mxu0 0
        %475 = vmatprep.subr.bf16.mxu0 0
        %476 = vmatpush1.bf16.msra.mxu0 0
        %477 = vmatprep.mubr.bf16.mxu0 0
        %478 = vmatmul.mubr.bf16.gmra.mrb[0].mxu0 %v373
        %v479 = vpop.f32.mrb[0].mxu0
        %v480 = vadd.f32 %v395, %v479
        %v481 = vpop.f32.mrb[0].mxu0
        %v482 = vpop.f32.mrb[0].mxu0
        %v483 = vadd.f32 %v395, %v482
        %v484 = vpop.f32.mrb[0].mxu0
        %485 = vdwg.mxu0
        %486 = vst [vmem:[%s241] sm:$0xff] %v480
        %487 = vst [vmem:[%s241 + $0x8] sm:$0xff] %v483
        %s488 = sand.u32 %s119, 1
        %s489 = scalar_lea.sflag [#allocation4], %s488
        %s490 = sand.u32 %s119, 1
        %s491 = smul.addr %s490, 16
        %s492 = scalar_lea.vmem [#allocation8], %s491
        // Predicated region
        $region49: #{tpu_custom_call.1} parent=35 // pred_check
          %p493 = pneg %p129
        $region50: #{tpu_custom_call.1} parent=35 // pred_check_branch
          %495 = sbr.rel (%p493) target = $region52
        $region51: #{tpu_custom_call.1} parent=35 // pred_region
          %s496 = smul.u32 2, %s22
          %s498 = ssub.s32 256, 256
          %499 = vsyncadd %s489, %s498
          %s500 = smul.addr %s496, 128
          %s501 = scalar_lea.hbm %s4, %s500
          %s502 = sshll.u32 %s492, 4
          %s503 = int_to_ptr.vmem [resolvable:$true] %s502
          %508 = dma.vmem_to_hbm [thread:$0]  %s503, 256, %s501, %s489, 128, 128, 8
        $region52: #{tpu_custom_call.1} parent=35 // pred_fallthru
          _
      $region36: #{tpu_custom_call.1} parent=5 // pred_fallthru
        _
      %p509 = scmp.le.s32.totalorder 2, %s17
      // Predicated region
      $region53: #{tpu_custom_call.1} parent=5 // pred_check
        %p510 = pneg %p509
      $region54: #{tpu_custom_call.1} parent=5 // pred_check_branch
        %512 = sbr.rel (%p510) target = $region56
      $region55: #{tpu_custom_call.1} parent=5 // pred_region
        %s513 = ssub.s32 %s17, 2
        // Predicated region
        $region57: #{tpu_custom_call.1} parent=55 // pred_check
          %p514 = pneg %p135
        $region58: #{tpu_custom_call.1} parent=55 // pred_check_branch
          %516 = sbr.rel (%p514) target = $region60
        $region59: #{tpu_custom_call.1} parent=55 // pred_region
          %s517 = sand.u32 %s120, 1
          %s518 = scalar_lea.sflag [#allocation4], %s517
          %s519 = sand.u32 %s120, 1
          %s520 = smul.addr %s519, 16
          %s521 = scalar_lea.vmem [#allocation8], %s520
          %522 = dma.done %s518, 256
        $region60: #{tpu_custom_call.1} parent=55 // pred_fallthru
          _
      $region56: #{tpu_custom_call.1} parent=5 // pred_fallthru
        _
    $region6: #{tpu_custom_call.1} parent=1 // loop_footer
      %s21 = sadd.s32 1, %s17
    $region7: #{tpu_custom_call.1} parent=1 // loop_footer_branch
      %16 = sbr.rel target = $region3
    $region8: #{tpu_custom_call.1} parent=1 // loop_exit
      _
    %523 = vsyncpa [#allocation3], 1
    %s524 = scalar_lea.sflag [#allocation3], 1
    %525 = vsyncpa %s524, 1
    %526 = vsyncpa [#allocation6], 1
    %527 = vsyncpa [#allocation4], 1
    %s528 = scalar_lea.sflag [#allocation4], 1
    %529 = vsyncpa %s528, 1

</llo_original>
